<compile_context>
chip_gen: v5e
topology: v5e:2x2
jax: 0.10.0
libtpu: 0.0.40
codegen_flags: <defaults>
</compile_context>

<pallas_src>
import jax
import jax.numpy as jnp
from jax import lax
from jax.experimental import pallas as pl
from jax.experimental.pallas import tpu as pltpu

NUM_EXPERTS = 2   # the PyTorch forward hardcodes the (wt, diff) pair
HIDDEN = 128      # expert hidden dim (fixed by the PyTorch module)


def _round_up(n, m):
    return ((n + m - 1) // m) * m


# --------------------------------------------------------------------------- #
# Kernel: grid = (batch_tiles, k_tiles).  The K axis streams the fused
# first-layer weight (seq-mean folded in) into an f32 accumulator; the epilogue
# (gating, leaky_relu, fused second layer) runs on the last K step.
# --------------------------------------------------------------------------- #
def moe_fused_kernel(x_ref, w1_ref, b1_ref, w2_ref, b2a_ref, b2b_ref,
                     out_ref, acc_ref):
    k = pl.program_id(1)

    @pl.when(k == 0)
    def _():
        acc_ref[...] = jnp.zeros_like(acc_ref)

    # One bf16 MXU matmul per (i, k): accumulates [gate_logit_diff | h0 | h1].
    acc_ref[...] += jnp.dot(x_ref[...], w1_ref[...],
                            preferred_element_type=jnp.float32)

    @pl.when(k == pl.num_programs(1) - 1)
    def _():
        r = acc_ref[...] + b1_ref[...]                       # [TB, 3H] f32

        # E == 2 gating: softmax([l0, l1])[0] == sigmoid(l0 - l1).  Column 0 of
        # the fused weight already holds (gw0 - gw1)/S, so r[:, 0:1] is l0 - l1.
        g0 = 1.0 / (1.0 + jnp.exp(-r[:, 0:1]))               # [TB, 1]
        g1 = 1.0 - g0                                        # exact partition

        # leaky_relu(slope=0.01) on both expert hiddens at once.
        h = r[:, HIDDEN:3 * HIDDEN]                          # [TB, 2H]
        h = jnp.where(h > 0, h, 0.01 * h)

        # Per-column gate map via a single VPU select (no concatenate copy).
        col = lax.broadcasted_iota(jnp.int32, h.shape, 1)
        g_cols = jnp.where(col < HIDDEN, g0, g1)             # [TB, 2H]
        h_gated = (h * g_cols).astype(w2_ref.dtype)

        # Fused second layer: [w2_0 ; w2_1] stacked, classes padded to 128 lanes
        # for unmasked stores; gated biases added in f32.
        out = jnp.dot(h_gated, w2_ref[...],
                      preferred_element_type=jnp.float32)    # [TB, CP]
        out = out + g0 * b2a_ref[...] + g1 * b2b_ref[...]
        out_ref[...] = out.astype(out_ref.dtype)


# --------------------------------------------------------------------------- #
# One-time parameter preprocessing (hoisted out of the forward).
# --------------------------------------------------------------------------- #
def fuse_params(params, seq_len, *, compute_dtype=jnp.bfloat16):
    """Fold seq-mean (1/S), channel split, gating and expert fc1 into one
    lane-dense weight; stack the two fc2 weights.  Returns bf16 matmul weights
    and f32 biases.  Call once and reuse across forward calls."""
    f32 = jnp.float32
    H = HIDDEN
    D = params["w1_0"].shape[0]
    C = params["w2_0"].shape[1]
    CP = _round_up(C, 128)
    S = seq_len
    K = NUM_EXPERTS * S * D
    inv_s = 1.0 / S

    # Row layout matches x.reshape(B, 2*S*D): wt[b,s,d] -> row s*D+d,
    # diff[b,s,d] -> row S*D+s*D+d.
    #   col 0      : (gw[:,0]-gw[:,1])/S  (gate logit difference, wt rows only)
    #   cols H:2H  : expert-0 fc1 / S     (wt rows)
    #   cols 2H:3H : expert-1 fc1 / S     (diff rows)
    gdiff = (params["gw"][:, 0:1] - params["gw"][:, 1:2]).astype(f32)
    w1 = jnp.zeros((K, 3 * H), f32)
    w1 = w1.at[:S * D, 0:1].set(jnp.tile(gdiff * inv_s, (S, 1)))
    w1 = w1.at[:S * D, H:2 * H].set(
        jnp.tile(params["w1_0"].astype(f32) * inv_s, (S, 1)))
    w1 = w1.at[S * D:, 2 * H:3 * H].set(
        jnp.tile(params["w1_1"].astype(f32) * inv_s, (S, 1)))

    b1 = jnp.zeros((1, 3 * H), f32)
    b1 = b1.at[:, 0:1].set(params["gb"][:, 0:1] - params["gb"][:, 1:2])
    b1 = b1.at[:, H:2 * H].set(params["b1_0"])
    b1 = b1.at[:, 2 * H:3 * H].set(params["b1_1"])

    w2 = jnp.zeros((2 * H, CP), f32)
    w2 = w2.at[:H, :C].set(params["w2_0"])
    w2 = w2.at[H:, :C].set(params["w2_1"])
    b2a = jnp.zeros((1, CP), f32).at[:, :C].set(params["b2_0"])
    b2b = jnp.zeros((1, CP), f32).at[:, :C].set(params["b2_1"])

    return {
        "w1": w1.astype(compute_dtype),   # bf16 MXU weights
        "b1": b1,                         # f32 biases / epilogue
        "w2": w2.astype(compute_dtype),
        "b2a": b2a,
        "b2b": b2b,
        "seq_len": S,
        "num_classes": C,
    }


# --------------------------------------------------------------------------- #
# Tiling helpers.
# --------------------------------------------------------------------------- #
def _batch_tiling(B, tb_target):
    # >= 2 grid steps when B is big enough so the "parallel" batch axis can be
    # sharded across both TensorCores on v7x (one extra ~0.35us step on 1-TC
    # chips is noise).  Minimal padding: TB = round_up(cdiv(B, n_tiles), 8).
    min_tiles = 2 if B >= 16 else 1
    n = max(pl.cdiv(B, tb_target), min_tiles)
    TB = _round_up(pl.cdiv(B, n), 8)
    BP = _round_up(B, TB)
    return TB, BP


def _choose_tk(K, kt_target):
    """Largest (8,128)-legal K tile <= kt_target that divides K; else whole K."""
    if K <= kt_target:
        return K
    t = kt_target - (kt_target % 128)
    while t >= 128:
        if K % t == 0:
            return t
        t -= 128
    return K


def _vmem_limit_bytes():
    # Generation-aware VMEM budget (v7x has 64 MiB, v5e/v6e 128 MiB).  Falls
    # back to the compiler default if the query is unavailable.
    try:
        cap = pltpu.get_tpu_info().vmem_capacity_bytes
        return int(min((cap * 3) // 4, 100 * 1024 * 1024))
    except Exception:
        return None


# --------------------------------------------------------------------------- #
# Forward wrapper.
# --------------------------------------------------------------------------- #
def moe_light_forward(x, fused, *, tb_target=512, kt_target=2048):
    """x: [B, 2, S, D]; fused = fuse_params(...); returns [B, num_classes] f32."""
    B, NC, S, D = x.shape
    assert NC == NUM_EXPERTS == 2, "forward hardcodes the (wt, diff) pair"
    assert S == fused["seq_len"], "fused params were built for a different S"
    H = HIDDEN
    C = fused["num_classes"]
    CP = fused["b2a"].shape[1]
    K = NC * S * D

    # Free row-major reshape + bf16 cast (halves x DMA bytes; MXU is bf16-native;
    # f32 accumulation preserved in-kernel via preferred_element_type).
    x_flat = x.reshape(B, K).astype(fused["w1"].dtype)

    TB, BP = _batch_tiling(B, tb_target)
    if BP > B:
        x_flat = jnp.pad(x_flat, ((0, BP - B), (0, 0)))
    TK = _choose_tk(K, kt_target)
    grid = (BP // TB, K // TK)

    itw = fused["w1"].dtype.itemsize
    itx = x_flat.dtype.itemsize
    cost = pl.CostEstimate(
        flops=int(2 * BP * K * (3 * H) + 2 * BP * (2 * H) * CP
                  + 8 * BP * (3 * H + CP)),
        transcendentals=int(BP),
        bytes_accessed=int(itx * BP * K + itw * K * 3 * H + 4 * 3 * H
                           + itw * 2 * H * CP + 4 * 2 * CP + 4 * BP * CP),
    )

    cp_kwargs = dict(dimension_semantics=("parallel", "arbitrary"))
    vlim = _vmem_limit_bytes()
    if vlim is not None:
        cp_kwargs["vmem_limit_bytes"] = vlim

    out = pl.pallas_call(
        moe_fused_kernel,
        out_shape=jax.ShapeDtypeStruct((BP, CP), jnp.float32),
        grid=grid,
        in_specs=[
            pl.BlockSpec((TB, TK), lambda i, k: (i, k)),       # x tile (pipelined)
            pl.BlockSpec((TK, 3 * H), lambda i, k: (k, 0)),    # streamed fused w1
            pl.BlockSpec((1, 3 * H), lambda i, k: (0, 0)),     # resident b1
            pl.BlockSpec((2 * H, CP), lambda i, k: (0, 0)),    # resident fused w2
            pl.BlockSpec((1, CP), lambda i, k: (0, 0)),        # resident b2 (e0)
            pl.BlockSpec((1, CP), lambda i, k: (0, 0)),        # resident b2 (e1)
        ],
        out_specs=pl.BlockSpec((TB, CP), lambda i, k: (i, 0)),
        scratch_shapes=[pltpu.VMEM((TB, 3 * H), jnp.float32)], # f32 accumulator
        compiler_params=pltpu.CompilerParams(**cp_kwargs),
        cost_estimate=cost,
    )(x_flat, fused["w1"], fused["b1"], fused["w2"], fused["b2a"], fused["b2b"])

    return out[:B, :C]


# --------------------------------------------------------------------------- #
# Parameter init + pure-JAX reference (f32) for checking.
# --------------------------------------------------------------------------- #
def init_params(key, input_dim, num_classes=3, num_experts=2):
    assert num_experts == NUM_EXPERTS
    ks = jax.random.split(key, 10)
    s = 0.1
    # Weights stored [in, out] so the math is x @ W + b (== PyTorch x @ W.T + b).
    return {
        "gw":   s * jax.random.normal(ks[0], (input_dim, num_experts), jnp.float32),
        "gb":   s * jax.random.normal(ks[1], (1, num_experts), jnp.float32),
        "w1_0": s * jax.random.normal(ks[2], (input_dim, HIDDEN), jnp.float32),
        "b1_0": s * jax.random.normal(ks[3], (1, HIDDEN), jnp.float32),
        "w2_0": s * jax.random.normal(ks[4], (HIDDEN, num_classes), jnp.float32),
        "b2_0": s * jax.random.normal(ks[5], (1, num_classes), jnp.float32),
        "w1_1": s * jax.random.normal(ks[6], (input_dim, HIDDEN), jnp.float32),
        "b1_1": s * jax.random.normal(ks[7], (1, HIDDEN), jnp.float32),
        "w2_1": s * jax.random.normal(ks[8], (HIDDEN, num_classes), jnp.float32),
        "b2_1": s * jax.random.normal(ks[9], (1, num_classes), jnp.float32),
    }


def moe_light_reference(x, p):
    wt, diff = x[:, 0, :, :], x[:, 1, :, :]
    wt_m, diff_m = wt.mean(axis=1), diff.mean(axis=1)
    gate = jax.nn.softmax(wt_m @ p["gw"] + p["gb"], axis=-1)

    def expert(m, w1, b1, w2, b2):
        h = m @ w1 + b1
        h = jnp.where(h > 0, h, 0.01 * h)
        return h @ w2 + b2

    o0 = expert(wt_m, p["w1_0"], p["b1_0"], p["w2_0"], p["b2_0"])
    o1 = expert(diff_m, p["w1_1"], p["b1_1"], p["w2_1"], p["b2_1"])
    eo = jnp.stack([o0, o1], axis=1)
    return jnp.sum(gate[..., None] * eo, axis=1)


if __name__ == "__main__":
    S, D, num_classes = 8, 32, 3
    key = jax.random.PRNGKey(0)
    kx, kp, kx2 = jax.random.split(key, 3)
    params = init_params(kp, D, num_classes)
    fused = fuse_params(params, S)          # built once, reused across calls

    # bf16 inputs/weights (f32 accumulation, exact sigmoid gating) vs f32 ref.
    TOL = 3e-2

    # Small case (single batch tile, single K tile).
    B = 2
    x = jax.random.normal(kx, (B, NUM_EXPERTS, S, D), jnp.float32)
    out = jax.block_until_ready(moe_light_forward(x, fused))
    ref = moe_light_reference(x, params)
    assert out.shape == (B, num_classes)
    assert jnp.allclose(out, ref, atol=TOL, rtol=TOL), (out, ref)

    # Larger batch: two balanced batch tiles (TB=152, 4 pad rows) -> megacore.
    B2 = 300
    x2 = jax.random.normal(kx2, (B2, NUM_EXPERTS, S, D), jnp.float32)
    out2 = jax.block_until_ready(moe_light_forward(x2, fused))
    ref2 = moe_light_reference(x2, params)
    assert out2.shape == (B2, num_classes)
    assert jnp.allclose(out2, ref2, atol=TOL, rtol=TOL)

    # Exercise the K-streaming accumulator path (grid (2, 2), TK=256): this is
    # the path large S*D uses so the fused w1 never has to be fully VMEM-resident.
    out3 = jax.block_until_ready(moe_light_forward(x2, fused, kt_target=256))
    assert jnp.allclose(out3, ref2, atol=TOL, rtol=TOL)

    print("KERNEL_OK")
</pallas_src>

<mosaic_0001>
module attributes {stable_mosaic.version = 11 : i64} {
  func.func @moe_fused_kernel(%arg0: i32, %arg1: i32, %arg2: memref<8x512xbf16, #tpu.memory_space<vmem>>, %arg3: memref<512x384xbf16, #tpu.memory_space<vmem>>, %arg4: memref<1x384xf32, #tpu.memory_space<vmem>>, %arg5: memref<256x128xbf16, #tpu.memory_space<vmem>>, %arg6: memref<1x128xf32, #tpu.memory_space<vmem>>, %arg7: memref<1x128xf32, #tpu.memory_space<vmem>>, %arg8: memref<8x128xf32, #tpu.memory_space<vmem>>, %arg9: memref<8x384xf32, #tpu.memory_space<vmem>>) attributes {dimension_semantics = [#tpu.dimension_semantics<parallel>, #tpu.dimension_semantics<arbitrary>], iteration_bounds = array<i64: 1, 1>, scalar_prefetch = 0 : i64, scratch_operands = 1 : i64, tpu.core_type = #tpu.core_type<tc>, window_params = [{transform_indices = @transform_0, window_bounds = array<i64: 8, 512>}, {transform_indices = @transform_1, window_bounds = array<i64: 512, 384>}, {pipeline_mode = #tpu.pipeline_mode<synchronous>, transform_indices = @transform_2, window_bounds = array<i64: 1, 384>}, {pipeline_mode = #tpu.pipeline_mode<synchronous>, transform_indices = @transform_3, window_bounds = array<i64: 256, 128>}, {pipeline_mode = #tpu.pipeline_mode<synchronous>, transform_indices = @transform_4, window_bounds = array<i64: 1, 128>}, {pipeline_mode = #tpu.pipeline_mode<synchronous>, transform_indices = @transform_5, window_bounds = array<i64: 1, 128>}, {transform_indices = @transform_6, window_bounds = array<i64: 8, 128>}]} {
    %c0_i32 = arith.constant 0 : i32
    %0 = arith.cmpi eq, %arg1, %c0_i32 : i32
    %1 = arith.extui %0 : i1 to i32
    %c0_i32_0 = arith.constant 0 : i32
    %2 = arith.cmpi ne, %1, %c0_i32_0 : i32
    scf.if %2 {
      %cst_10 = arith.constant 0.000000e+00 : f32
      %12 = vector.broadcast %cst_10 : f32 to vector<8x384xf32>
      %c0_11 = arith.constant 0 : index
      %c0_12 = arith.constant 0 : index
      %13 = vector.load %arg9[%c0_11, %c0_12] : memref<8x384xf32, #tpu.memory_space<vmem>>, vector<8x384xf32>
      tpu.vector_store %arg9[%c0_11, %c0_12], %12 {strides = array<i32>} : memref<8x384xf32, #tpu.memory_space<vmem>>, vector<8x384xf32>,
    } else {
    }
    %c0 = arith.constant 0 : index
    %c0_1 = arith.constant 0 : index
    %3 = vector.load %arg9[%c0, %c0_1] : memref<8x384xf32, #tpu.memory_space<vmem>>, vector<8x384xf32>
    %c0_2 = arith.constant 0 : index
    %c0_3 = arith.constant 0 : index
    %4 = vector.load %arg2[%c0_2, %c0_3] : memref<8x512xbf16, #tpu.memory_space<vmem>>, vector<8x512xbf16>
    %c0_4 = arith.constant 0 : index
    %c0_5 = arith.constant 0 : index
    %5 = vector.load %arg3[%c0_4, %c0_5] : memref<512x384xbf16, #tpu.memory_space<vmem>>, vector<512x384xbf16>
    %cst = arith.constant dense<0.000000e+00> : vector<8x384xf32>
    %6 = tpu.matmul %4, %5, %cst {dimension_numbers = #tpu.dot_dimension_numbers<[1], [0], [0], [1], [0, 0, 1, 1], [], []>} : vector<8x512xbf16>, vector<512x384xbf16>, vector<8x384xf32> -> vector<8x384xf32>
    %7 = arith.addf %3, %6 : vector<8x384xf32>
    %c0_6 = arith.constant 0 : index
    %c0_7 = arith.constant 0 : index
    %8 = vector.load %arg9[%c0_6, %c0_7] : memref<8x384xf32, #tpu.memory_space<vmem>>, vector<8x384xf32>
    tpu.vector_store %arg9[%c0_6, %c0_7], %7 {strides = array<i32>} : memref<8x384xf32, #tpu.memory_space<vmem>>, vector<8x384xf32>,
    %c0_i32_8 = arith.constant 0 : i32
    %9 = arith.cmpi eq, %arg1, %c0_i32_8 : i32
    %10 = arith.extui %9 : i1 to i32
    %c0_i32_9 = arith.constant 0 : i32
    %11 = arith.cmpi ne, %10, %c0_i32_9 : i32
    scf.if %11 {
      %c0_10 = arith.constant 0 : index
      %c0_11 = arith.constant 0 : index
      %12 = vector.load %arg9[%c0_10, %c0_11] : memref<8x384xf32, #tpu.memory_space<vmem>>, vector<8x384xf32>
      %c0_12 = arith.constant 0 : index
      %c0_13 = arith.constant 0 : index
      %13 = vector.load %arg4[%c0_12, %c0_13] : memref<1x384xf32, #tpu.memory_space<vmem>>, vector<1x384xf32>
      %14 = vector.broadcast %13 : vector<1x384xf32> to vector<8x384xf32>
      %15 = arith.addf %12, %14 : vector<8x384xf32>
      %16 = vector.extract_strided_slice %15 {offsets = [0, 0], sizes = [8, 1], strides = [1, 1]} : vector<8x384xf32> to vector<8x1xf32>
      %cst_14 = arith.constant 0.000000e+00 : f32
      %17 = vector.broadcast %cst_14 : f32 to vector<8x1xf32>
      %18 = arith.subf %17, %16 : vector<8x1xf32>
      %19 = math.exp %18 : vector<8x1xf32>
      %cst_15 = arith.constant 1.000000e+00 : f32
      %20 = vector.broadcast %cst_15 : f32 to vector<8x1xf32>
      %21 = arith.addf %20, %19 : vector<8x1xf32>
      %cst_16 = arith.constant 1.000000e+00 : f32
      %22 = vector.broadcast %cst_16 : f32 to vector<8x1xf32>
      %23 = arith.divf %22, %21 : vector<8x1xf32>
      %cst_17 = arith.constant 1.000000e+00 : f32
      %24 = vector.broadcast %cst_17 : f32 to vector<8x1xf32>
      %25 = arith.subf %24, %23 : vector<8x1xf32>
      %26 = vector.extract_strided_slice %15 {offsets = [0, 128], sizes = [8, 256], strides = [1, 1]} : vector<8x384xf32> to vector<8x256xf32>
      %cst_18 = arith.constant 0.000000e+00 : f32
      %27 = vector.broadcast %cst_18 : f32 to vector<8x256xf32>
      %28 = arith.cmpf ogt, %26, %27 : vector<8x256xf32>
      %cst_19 = arith.constant 0.00999999977 : f32
      %29 = vector.broadcast %cst_19 : f32 to vector<8x256xf32>
      %30 = arith.mulf %29, %26 : vector<8x256xf32>
      %31 = arith.select %28, %26, %30 : vector<8x256xi1>, vector<8x256xf32>
      %32 = tpu.iota {dimensions = array<i32: 1>} : vector<8x256xi32>
      %c128_i32 = arith.constant 128 : i32
      %33 = vector.broadcast %c128_i32 : i32 to vector<8x256xi32>
      %34 = arith.cmpi slt, %32, %33 : vector<8x256xi32>
      %35 = vector.shape_cast %23 : vector<8x1xf32> to vector<8x1xf32>
      %36 = vector.broadcast %35 : vector<8x1xf32> to vector<8x256xf32>
      %37 = vector.shape_cast %25 : vector<8x1xf32> to vector<8x1xf32>
      %38 = vector.broadcast %37 : vector<8x1xf32> to vector<8x256xf32>
      %39 = arith.select %34, %36, %38 : vector<8x256xi1>, vector<8x256xf32>
      %40 = arith.mulf %31, %39 : vector<8x256xf32>
      %41 = arith.truncf %40 : vector<8x256xf32> to vector<8x256xbf16>
      %c0_20 = arith.constant 0 : index
      %c0_21 = arith.constant 0 : index
      %42 = vector.load %arg5[%c0_20, %c0_21] : memref<256x128xbf16, #tpu.memory_space<vmem>>, vector<256x128xbf16>
      %cst_22 = arith.constant dense<0.000000e+00> : vector<8x128xf32>
      %43 = tpu.matmul %41, %42, %cst_22 {dimension_numbers = #tpu.dot_dimension_numbers<[1], [0], [0], [1], [0, 0, 1, 1], [], []>} : vector<8x256xbf16>, vector<256x128xbf16>, vector<8x128xf32> -> vector<8x128xf32>
      %c0_23 = arith.constant 0 : index
      %c0_24 = arith.constant 0 : index
      %44 = vector.load %arg6[%c0_23, %c0_24] : memref<1x128xf32, #tpu.memory_space<vmem>>, vector<1x128xf32>
      %45 = vector.broadcast %23 : vector<8x1xf32> to vector<8x128xf32>
      %46 = vector.broadcast %44 : vector<1x128xf32> to vector<8x128xf32>
      %47 = arith.mulf %45, %46 : vector<8x128xf32>
      %48 = arith.addf %43, %47 : vector<8x128xf32>
      %c0_25 = arith.constant 0 : index
      %c0_26 = arith.constant 0 : index
      %49 = vector.load %arg7[%c0_25, %c0_26] : memref<1x128xf32, #tpu.memory_space<vmem>>, vector<1x128xf32>
      %50 = vector.broadcast %25 : vector<8x1xf32> to vector<8x128xf32>
      %51 = vector.broadcast %49 : vector<1x128xf32> to vector<8x128xf32>
      %52 = arith.mulf %50, %51 : vector<8x128xf32>
      %53 = arith.addf %48, %52 : vector<8x128xf32>
      %c0_27 = arith.constant 0 : index
      %c0_28 = arith.constant 0 : index
      %54 = vector.load %arg8[%c0_27, %c0_28] : memref<8x128xf32, #tpu.memory_space<vmem>>, vector<8x128xf32>
      tpu.vector_store %arg8[%c0_27, %c0_28], %53 {strides = array<i32>} : memref<8x128xf32, #tpu.memory_space<vmem>>, vector<8x128xf32>,
    } else {
    }
    return
  }
  func.func @transform_0(%arg0: i32, %arg1: i32) -> (i32, i32) {
    %c0_i32 = arith.constant 0 : i32
    return %arg0, %arg1 : i32, i32
  }
  func.func @transform_1(%arg0: i32, %arg1: i32) -> (i32, i32) {
    %c0_i32 = arith.constant 0 : i32
    %c0_i32_0 = arith.constant 0 : i32
    return %arg1, %c0_i32 : i32, i32
  }
  func.func @transform_2(%arg0: i32, %arg1: i32) -> (i32, i32) {
    %c0_i32 = arith.constant 0 : i32
    %c0_i32_0 = arith.constant 0 : i32
    %c0_i32_1 = arith.constant 0 : i32
    return %c0_i32, %c0_i32_0 : i32, i32
  }
  func.func @transform_3(%arg0: i32, %arg1: i32) -> (i32, i32) {
    %c0_i32 = arith.constant 0 : i32
    %c0_i32_0 = arith.constant 0 : i32
    %c0_i32_1 = arith.constant 0 : i32
    return %c0_i32, %c0_i32_0 : i32, i32
  }
  func.func @transform_4(%arg0: i32, %arg1: i32) -> (i32, i32) {
    %c0_i32 = arith.constant 0 : i32
    %c0_i32_0 = arith.constant 0 : i32
    %c0_i32_1 = arith.constant 0 : i32
    return %c0_i32, %c0_i32_0 : i32, i32
  }
  func.func @transform_5(%arg0: i32, %arg1: i32) -> (i32, i32) {
    %c0_i32 = arith.constant 0 : i32
    %c0_i32_0 = arith.constant 0 : i32
    %c0_i32_1 = arith.constant 0 : i32
    return %c0_i32, %c0_i32_0 : i32, i32
  }
  func.func @transform_6(%arg0: i32, %arg1: i32) -> (i32, i32) {
    %c0_i32 = arith.constant 0 : i32
    %c0_i32_0 = arith.constant 0 : i32
    return %arg0, %c0_i32 : i32, i32
  }
}

</mosaic_0001>

<llo_original>
// kernel: tpu_custom_call.1
$region0: #{tpu_custom_call.1}
  #allocation0 [shape = 'u32[]', space=smem, size = 0x4, offset = 0x4, fixed_abs, tag = 'smem constant byte address 0x4 - core index']
  #allocation1 [shape = 'u32[72,128]{1,0:T(1,128)}', space=vmem, size = 0x9000, scoped, tag = 'internal scratch']
  #allocation2 [shape = 'f32[8,384]{1,0:T(8,128)}', space=vmem, size = 0x3000, scoped, tag = 'scratch operand']
  %s0 = inlined_call_operand.hbm [shape: bf16[8,512], index: 0, kind: input, shape index: {}]
  %s1 = inlined_call_operand.hbm [shape: bf16[512,384], index: 1, kind: input, shape index: {}]
  %s2 = inlined_call_operand.hbm [shape: f32[1,384], index: 2, kind: input, shape index: {}]
  %s3 = inlined_call_operand.hbm [shape: bf16[256,128], index: 3, kind: input, shape index: {}]
  %s4 = inlined_call_operand.vmem [shape: f32[1,128], index: 4, kind: input, shape index: {}]
  %s5 = inlined_call_operand.vmem [shape: f32[1,128], index: 5, kind: input, shape index: {}]
  %s6 = inlined_call_operand.hbm [shape: f32[8,128], index: 6, kind: output, shape index: {}]
  %s7 = sld [smem:[#allocation0]]
  $region58: #{tpu_custom_call.1} parent=0
    _
  %s9 = ssub.s32 1, %s7
  %s10 = scalar_select 0, %s9, %s7
  $region1: #{tpu_custom_call.1} parent=0
    #allocation3 [shape = 'u8[8192]{0}', space=vmem, size = 0x2000, scoped, tag = 'input window, operand 0, single buffered']
    #allocation4 [shape = 's32[1]{0}', space=sflag, size = 0x4, scoped, tag = 'scoped memory for tpu_custom_call.1']
    #allocation5 [shape = 's32[1]{0}', space=sflag, size = 0x4, scoped, tag = 'scoped memory for tpu_custom_call.1']
    #allocation6 [shape = 'u8[393216]{0}', space=vmem, size = 0x60000, scoped, tag = 'input window, operand 1, single buffered']
    #allocation7 [shape = 's32[1]{0}', space=sflag, size = 0x4, scoped, tag = 'scoped memory for tpu_custom_call.1']
    #allocation8 [shape = 'u8[1536]{0}', space=vmem, size = 0x800, scoped, tag = 'input window, operand 2, single buffered']
    #allocation9 [shape = 'u8[65536]{0}', space=vmem, size = 0x10000, scoped, tag = 'input window, operand 3, single buffered']
    #allocation10 [shape = 's32[1]{0}', space=sflag, size = 0x4, scoped, tag = 'scoped memory for tpu_custom_call.1']
    #allocation11 [shape = 'u8[4096]{0}', space=vmem, size = 0x1000, scoped, tag = 'output window, operand 0, single buffered']
    %11 = vsyncpa [#allocation4], 0
    %12 = vsyncpa [#allocation7], 0
    %13 = vsyncpa [#allocation10], 0
    %14 = vsyncpa [#allocation5], 0
    // Predicated region
    $region2: #{tpu_custom_call.1} parent=1 // pred_check
      _
    $region3: #{tpu_custom_call.1} parent=1 // pred_check_branch
      %16 = sbr.rel (0) target = $region5
    $region4: #{tpu_custom_call.1} parent=1 // pred_region
      %18 = vsyncadd [#allocation4], 0
      %s20 = sshll.u32 %s0, 4
      %s21 = int_to_ptr.hbm [resolvable:$true] %s20
      %s22 = sshll.u32 [#allocation3], 4
      %s23 = int_to_ptr.vmem [resolvable:$true] %s22
      %25 = dma.hbm_to_vmem [thread:$0]  %s21, 256, %s23, [#allocation4]
    $region5: #{tpu_custom_call.1} parent=1 // pred_fallthru
      _
    // Predicated region
    $region6: #{tpu_custom_call.1} parent=1 // pred_check
      _
    $region7: #{tpu_custom_call.1} parent=1 // pred_check_branch
      %27 = sbr.rel (0) target = $region9
    $region8: #{tpu_custom_call.1} parent=1 // pred_region
      %29 = vsyncadd [#allocation7], 0
      %s30 = sshll.u32 %s1, 4
      %s31 = int_to_ptr.hbm [resolvable:$true] %s30
      %s32 = sshll.u32 [#allocation6], 4
      %s33 = int_to_ptr.vmem [resolvable:$true] %s32
      %38 = dma.hbm_to_vmem [thread:$0]  %s31, 12288, %s33, [#allocation7], 192, 192, 12
    $region9: #{tpu_custom_call.1} parent=1 // pred_fallthru
      _
    // Predicated region
    $region10: #{tpu_custom_call.1} parent=1 // pred_check
      _
    $region11: #{tpu_custom_call.1} parent=1 // pred_check_branch
      %40 = sbr.rel (0) target = $region13
    $region12: #{tpu_custom_call.1} parent=1 // pred_region
      %42 = vsyncadd [#allocation7], 0
      %s44 = sshll.u32 %s2, 4
      %s45 = int_to_ptr.hbm [resolvable:$true] %s44
      %s46 = sshll.u32 [#allocation8], 4
      %s47 = int_to_ptr.vmem [resolvable:$true] %s46
      %49 = dma.hbm_to_vmem [thread:$0]  %s45, 48, %s47, [#allocation7]
    $region13: #{tpu_custom_call.1} parent=1 // pred_fallthru
      _
    // Predicated region
    $region14: #{tpu_custom_call.1} parent=1 // pred_check
      _
    $region15: #{tpu_custom_call.1} parent=1 // pred_check_branch
      %51 = sbr.rel (0) target = $region17
    $region16: #{tpu_custom_call.1} parent=1 // pred_region
      %53 = vsyncadd [#allocation10], 0
      %s54 = sshll.u32 %s3, 4
      %s55 = int_to_ptr.hbm [resolvable:$true] %s54
      %s56 = sshll.u32 [#allocation9], 4
      %s57 = int_to_ptr.vmem [resolvable:$true] %s56
      %62 = dma.hbm_to_vmem [thread:$0]  %s55, 2048, %s57, [#allocation10], 64, 64, 4
    $region17: #{tpu_custom_call.1} parent=1 // pred_fallthru
      _
    // Predicated region
    $region18: #{tpu_custom_call.1} parent=1 // pred_check
      _
    $region19: #{tpu_custom_call.1} parent=1 // pred_check_branch
      %64 = sbr.rel (0) target = $region21
    $region20: #{tpu_custom_call.1} parent=1 // pred_region
      _
    $region21: #{tpu_custom_call.1} parent=1 // pred_fallthru
      _
    // Predicated region
    $region22: #{tpu_custom_call.1} parent=1 // pred_check
      _
    $region23: #{tpu_custom_call.1} parent=1 // pred_check_branch
      %66 = sbr.rel (0) target = $region25
    $region24: #{tpu_custom_call.1} parent=1 // pred_region
      _
    $region25: #{tpu_custom_call.1} parent=1 // pred_fallthru
      _
    // Predicated region
    $region26: #{tpu_custom_call.1} parent=1 // pred_check
      _
    $region27: #{tpu_custom_call.1} parent=1 // pred_check_branch
      %68 = sbr.rel (0) target = $region29
    $region28: #{tpu_custom_call.1} parent=1 // pred_region
      %70 = dma.done [#allocation4], 256
    $region29: #{tpu_custom_call.1} parent=1 // pred_fallthru
      _
    // Predicated region
    $region30: #{tpu_custom_call.1} parent=1 // pred_check
      _
    $region31: #{tpu_custom_call.1} parent=1 // pred_check_branch
      %72 = sbr.rel (0) target = $region33
    $region32: #{tpu_custom_call.1} parent=1 // pred_region
      %74 = dma.done [#allocation7], 12288
    $region33: #{tpu_custom_call.1} parent=1 // pred_fallthru
      _
    // Predicated region
    $region34: #{tpu_custom_call.1} parent=1 // pred_check
      _
    $region35: #{tpu_custom_call.1} parent=1 // pred_check_branch
      %76 = sbr.rel (0) target = $region37
    $region36: #{tpu_custom_call.1} parent=1 // pred_region
      %78 = dma.done [#allocation7], 48
    $region37: #{tpu_custom_call.1} parent=1 // pred_fallthru
      _
    // Predicated region
    $region38: #{tpu_custom_call.1} parent=1 // pred_check
      _
    $region39: #{tpu_custom_call.1} parent=1 // pred_check_branch
      %80 = sbr.rel (0) target = $region41
    $region40: #{tpu_custom_call.1} parent=1 // pred_region
      %82 = dma.done [#allocation10], 2048
    $region41: #{tpu_custom_call.1} parent=1 // pred_fallthru
      _
    %p83 = scmp.eq.s32.totalorder 0, 0
    // Predicated region
    $region42: #{tpu_custom_call.1} parent=1 // pred_check
      %p84 = pneg %p83
    $region43: #{tpu_custom_call.1} parent=1 // pred_check_branch
      %86 = sbr.rel (%p84) target = $region45
    $region44: #{tpu_custom_call.1} parent=1 // pred_region
      %87 = vst [vmem:[#allocation2] sm:$0xff] 0.0
      %88 = vst [vmem:[#allocation2 + $0x8] sm:$0xff] 0.0
      %89 = vst [vmem:[#allocation2 + $0x10] sm:$0xff] 0.0
    $region45: #{tpu_custom_call.1} parent=1 // pred_fallthru
      _
    %v90 = vld [vmem:[#allocation2] sm:$0xff]
    %v91 = vld [vmem:[#allocation2 + $0x8] sm:$0xff]
    %v92 = vld [vmem:[#allocation2 + $0x10] sm:$0xff]
    %v93 = vld [vmem:[#allocation3] sm:$0xff]
    %v94 = vld [vmem:[#allocation3 + $0x8] sm:$0xff]
    %v95 = vld [vmem:[#allocation6] sm:$0xff]
    %v96 = vld [vmem:[#allocation6 + $0x8] sm:$0xf]
    %v97 = vld [vmem:[#allocation6 + $0xc] sm:$0xff]
    %v98 = vld [vmem:[#allocation6 + $0x14] sm:$0xf]
    %v99 = vld [vmem:[#allocation6 + $0x18] sm:$0xff]
    %v100 = vld [vmem:[#allocation6 + $0x20] sm:$0xf]
    %v101 = vld [vmem:[#allocation6 + $0x24] sm:$0xff]
    %v102 = vld [vmem:[#allocation6 + $0x2c] sm:$0xf]
    %v103 = vld [vmem:[#allocation6 + $0x30] sm:$0xff]
    %v104 = vld [vmem:[#allocation6 + $0x38] sm:$0xf]
    %v105 = vld [vmem:[#allocation6 + $0x3c] sm:$0xff]
    %v106 = vld [vmem:[#allocation6 + $0x44] sm:$0xf]
    %v107 = vld [vmem:[#allocation6 + $0x48] sm:$0xff]
    %v108 = vld [vmem:[#allocation6 + $0x50] sm:$0xf]
    %v109 = vld [vmem:[#allocation6 + $0x54] sm:$0xff]
    %v110 = vld [vmem:[#allocation6 + $0x5c] sm:$0xf]
    %v111 = vld [vmem:[#allocation6 + $0x60] sm:$0xff]
    %v112 = vld [vmem:[#allocation6 + $0x68] sm:$0xf]
    %v113 = vld [vmem:[#allocation6 + $0x6c] sm:$0xff]
    %v114 = vld [vmem:[#allocation6 + $0x74] sm:$0xf]
    %v115 = vld [vmem:[#allocation6 + $0x78] sm:$0xff]
    %v116 = vld [vmem:[#allocation6 + $0x80] sm:$0xf]
    %v117 = vld [vmem:[#allocation6 + $0x84] sm:$0xff]
    %v118 = vld [vmem:[#allocation6 + $0x8c] sm:$0xf]
    %v119 = vld [vmem:[#allocation6 + $0x90] sm:$0xff]
    %v120 = vld [vmem:[#allocation6 + $0x98] sm:$0xf]
    %v121 = vld [vmem:[#allocation6 + $0x9c] sm:$0xff]
    %v122 = vld [vmem:[#allocation6 + $0xa4] sm:$0xf]
    %v123 = vld [vmem:[#allocation6 + $0xa8] sm:$0xff]
    %v124 = vld [vmem:[#allocation6 + $0xb0] sm:$0xf]
    %v125 = vld [vmem:[#allocation6 + $0xb4] sm:$0xff]
    %v126 = vld [vmem:[#allocation6 + $0xbc] sm:$0xf]
    %v127 = vld [vmem:[#allocation6 + $0xc0] sm:$0xff]
    %v128 = vld [vmem:[#allocation6 + $0xc8] sm:$0xf]
    %v129 = vld [vmem:[#allocation6 + $0xcc] sm:$0xff]
    %v130 = vld [vmem:[#allocation6 + $0xd4] sm:$0xf]
    %v131 = vld [vmem:[#allocation6 + $0xd8] sm:$0xff]
    %v132 = vld [vmem:[#allocation6 + $0xe0] sm:$0xf]
    %v133 = vld [vmem:[#allocation6 + $0xe4] sm:$0xff]
    %v134 = vld [vmem:[#allocation6 + $0xec] sm:$0xf]
    %v135 = vld [vmem:[#allocation6 + $0xf0] sm:$0xff]
    %v136 = vld [vmem:[#allocation6 + $0xf8] sm:$0xf]
    %v137 = vld [vmem:[#allocation6 + $0xfc] sm:$0xff]
    %v138 = vld [vmem:[#allocation6 + $0x104] sm:$0xf]
    %v139 = vld [vmem:[#allocation6 + $0x108] sm:$0xff]
    %v140 = vld [vmem:[#allocation6 + $0x110] sm:$0xf]
    %v141 = vld [vmem:[#allocation6 + $0x114] sm:$0xff]
    %v142 = vld [vmem:[#allocation6 + $0x11c] sm:$0xf]
    %v143 = vld [vmem:[#allocation6 + $0x120] sm:$0xff]
    %v144 = vld [vmem:[#allocation6 + $0x128] sm:$0xf]
    %v145 = vld [vmem:[#allocation6 + $0x12c] sm:$0xff]
    %v146 = vld [vmem:[#allocation6 + $0x134] sm:$0xf]
    %v147 = vld [vmem:[#allocation6 + $0x138] sm:$0xff]
    %v148 = vld [vmem:[#allocation6 + $0x140] sm:$0xf]
    %v149 = vld [vmem:[#allocation6 + $0x144] sm:$0xff]
    %v150 = vld [vmem:[#allocation6 + $0x14c] sm:$0xf]
    %v151 = vld [vmem:[#allocation6 + $0x150] sm:$0xff]
    %v152 = vld [vmem:[#allocation6 + $0x158] sm:$0xf]
    %v153 = vld [vmem:[#allocation6 + $0x15c] sm:$0xff]
    %v154 = vld [vmem:[#allocation6 + $0x164] sm:$0xf]
    %v155 = vld [vmem:[#allocation6 + $0x168] sm:$0xff]
    %v156 = vld [vmem:[#allocation6 + $0x170] sm:$0xf]
    %v157 = vld [vmem:[#allocation6 + $0x174] sm:$0xff]
    %v158 = vld [vmem:[#allocation6 + $0x17c] sm:$0xf]
    %v159 = vld [vmem:[#allocation6 + $0x180] sm:$0xff]
    %v160 = vld [vmem:[#allocation6 + $0x188] sm:$0xf]
    %v161 = vld [vmem:[#allocation6 + $0x18c] sm:$0xff]
    %v162 = vld [vmem:[#allocation6 + $0x194] sm:$0xf]
    %v163 = vld [vmem:[#allocation6 + $0x198] sm:$0xff]
    %v164 = vld [vmem:[#allocation6 + $0x1a0] sm:$0xf]
    %v165 = vld [vmem:[#allocation6 + $0x1a4] sm:$0xff]
    %v166 = vld [vmem:[#allocation6 + $0x1ac] sm:$0xf]
    %v167 = vld [vmem:[#allocation6 + $0x1b0] sm:$0xff]
    %v168 = vld [vmem:[#allocation6 + $0x1b8] sm:$0xf]
    %v169 = vld [vmem:[#allocation6 + $0x1bc] sm:$0xff]
    %v170 = vld [vmem:[#allocation6 + $0x1c4] sm:$0xf]
    %v171 = vld [vmem:[#allocation6 + $0x1c8] sm:$0xff]
    %v172 = vld [vmem:[#allocation6 + $0x1d0] sm:$0xf]
    %v173 = vld [vmem:[#allocation6 + $0x1d4] sm:$0xff]
    %v174 = vld [vmem:[#allocation6 + $0x1dc] sm:$0xf]
    %v175 = vld [vmem:[#allocation6 + $0x1e0] sm:$0xff]
    %v176 = vld [vmem:[#allocation6 + $0x1e8] sm:$0xf]
    %v177 = vld [vmem:[#allocation6 + $0x1ec] sm:$0xff]
    %v178 = vld [vmem:[#allocation6 + $0x1f4] sm:$0xf]
    %v179 = vld [vmem:[#allocation6 + $0x1f8] sm:$0xff]
    %v180 = vld [vmem:[#allocation6 + $0x200] sm:$0xf]
    %v181 = vld [vmem:[#allocation6 + $0x204] sm:$0xff]
    %v182 = vld [vmem:[#allocation6 + $0x20c] sm:$0xf]
    %v183 = vld [vmem:[#allocation6 + $0x210] sm:$0xff]
    %v184 = vld [vmem:[#allocation6 + $0x218] sm:$0xf]
    %v185 = vld [vmem:[#allocation6 + $0x21c] sm:$0xff]
    %v186 = vld [vmem:[#allocation6 + $0x224] sm:$0xf]
    %v187 = vld [vmem:[#allocation6 + $0x228] sm:$0xff]
    %v188 = vld [vmem:[#allocation6 + $0x230] sm:$0xf]
    %v189 = vld [vmem:[#allocation6 + $0x234] sm:$0xff]
    %v190 = vld [vmem:[#allocation6 + $0x23c] sm:$0xf]
    %v191 = vld [vmem:[#allocation6 + $0x240] sm:$0xff]
    %v192 = vld [vmem:[#allocation6 + $0x248] sm:$0xf]
    %v193 = vld [vmem:[#allocation6 + $0x24c] sm:$0xff]
    %v194 = vld [vmem:[#allocation6 + $0x254] sm:$0xf]
    %v195 = vld [vmem:[#allocation6 + $0x258] sm:$0xff]
    %v196 = vld [vmem:[#allocation6 + $0x260] sm:$0xf]
    %v197 = vld [vmem:[#allocation6 + $0x264] sm:$0xff]
    %v198 = vld [vmem:[#allocation6 + $0x26c] sm:$0xf]
    %v199 = vld [vmem:[#allocation6 + $0x270] sm:$0xff]
    %v200 = vld [vmem:[#allocation6 + $0x278] sm:$0xf]
    %v201 = vld [vmem:[#allocation6 + $0x27c] sm:$0xff]
    %v202 = vld [vmem:[#allocation6 + $0x284] sm:$0xf]
    %v203 = vld [vmem:[#allocation6 + $0x288] sm:$0xff]
    %v204 = vld [vmem:[#allocation6 + $0x290] sm:$0xf]
    %v205 = vld [vmem:[#allocation6 + $0x294] sm:$0xff]
    %v206 = vld [vmem:[#allocation6 + $0x29c] sm:$0xf]
    %v207 = vld [vmem:[#allocation6 + $0x2a0] sm:$0xff]
    %v208 = vld [vmem:[#allocation6 + $0x2a8] sm:$0xf]
    %v209 = vld [vmem:[#allocation6 + $0x2ac] sm:$0xff]
    %v210 = vld [vmem:[#allocation6 + $0x2b4] sm:$0xf]
    %v211 = vld [vmem:[#allocation6 + $0x2b8] sm:$0xff]
    %v212 = vld [vmem:[#allocation6 + $0x2c0] sm:$0xf]
    %v213 = vld [vmem:[#allocation6 + $0x2c4] sm:$0xff]
    %v214 = vld [vmem:[#allocation6 + $0x2cc] sm:$0xf]
    %v215 = vld [vmem:[#allocation6 + $0x2d0] sm:$0xff]
    %v216 = vld [vmem:[#allocation6 + $0x2d8] sm:$0xf]
    %v217 = vld [vmem:[#allocation6 + $0x2dc] sm:$0xff]
    %v218 = vld [vmem:[#allocation6 + $0x2e4] sm:$0xf]
    %v219 = vld [vmem:[#allocation6 + $0x2e8] sm:$0xff]
    %v220 = vld [vmem:[#allocation6 + $0x2f0] sm:$0xf]
    %v221 = vld [vmem:[#allocation6 + $0x2f4] sm:$0xff]
    %v222 = vld [vmem:[#allocation6 + $0x2fc] sm:$0xf]
    %v225 = vunpack.c.l.b16 %v93
    %v226 = vunpack.c.h.b16 %v93
    %v227 = vunpack.c.l.b16 %v94
    %v228 = vunpack.c.h.b16 %v94
    %v229 = vpack.c.b16 %v225, %v225
    %v230 = vpack.c.b16 %v226, %v226
    %v231 = vpack.c.b16 %v227, %v227
    %v232 = vpack.c.b16 %v228, %v228
    %v365 = vunpack.c.l.b16 %v95
    %v366 = vunpack.c.h.b16 %v95
    %v367 = vunpack.c.l.b16 %v96
    %v368 = vunpack.c.l.b16 %v97
    %v369 = vunpack.c.h.b16 %v97
    %v370 = vunpack.c.l.b16 %v98
    %v371 = vunpack.c.l.b16 %v99
    %v372 = vunpack.c.h.b16 %v99
    %v373 = vunpack.c.l.b16 %v100
    %v374 = vunpack.c.l.b16 %v101
    %v375 = vunpack.c.h.b16 %v101
    %v376 = vunpack.c.l.b16 %v102
    %v377 = vunpack.c.l.b16 %v103
    %v378 = vunpack.c.h.b16 %v103
    %v379 = vunpack.c.l.b16 %v104
    %v380 = vunpack.c.l.b16 %v105
    %v381 = vunpack.c.h.b16 %v105
    %v382 = vunpack.c.l.b16 %v106
    %v383 = vunpack.c.l.b16 %v107
    %v384 = vunpack.c.h.b16 %v107
    %v385 = vunpack.c.l.b16 %v108
    %v386 = vunpack.c.l.b16 %v109
    %v387 = vunpack.c.h.b16 %v109
    %v388 = vunpack.c.l.b16 %v110
    %v389 = vunpack.c.l.b16 %v111
    %v390 = vunpack.c.h.b16 %v111
    %v391 = vunpack.c.l.b16 %v112
    %v392 = vunpack.c.l.b16 %v113
    %v393 = vunpack.c.h.b16 %v113
    %v394 = vunpack.c.l.b16 %v114
    %v395 = vunpack.c.l.b16 %v115
    %v396 = vunpack.c.h.b16 %v115
    %v397 = vunpack.c.l.b16 %v116
    %v398 = vunpack.c.l.b16 %v117
    %v399 = vunpack.c.h.b16 %v117
    %v400 = vunpack.c.l.b16 %v118
    %v401 = vunpack.c.l.b16 %v119
    %v402 = vunpack.c.h.b16 %v119
    %v403 = vunpack.c.l.b16 %v120
    %v404 = vunpack.c.l.b16 %v121
    %v405 = vunpack.c.h.b16 %v121
    %v406 = vunpack.c.l.b16 %v122
    %v407 = vunpack.c.l.b16 %v123
    %v408 = vunpack.c.h.b16 %v123
    %v409 = vunpack.c.l.b16 %v124
    %v410 = vunpack.c.l.b16 %v125
    %v411 = vunpack.c.h.b16 %v125
    %v412 = vunpack.c.l.b16 %v126
    %v413 = vunpack.c.l.b16 %v127
    %v414 = vunpack.c.h.b16 %v127
    %v415 = vunpack.c.l.b16 %v128
    %v416 = vunpack.c.l.b16 %v129
    %v417 = vunpack.c.h.b16 %v129
    %v418 = vunpack.c.l.b16 %v130
    %v419 = vunpack.c.l.b16 %v131
    %v420 = vunpack.c.h.b16 %v131
    %v421 = vunpack.c.l.b16 %v132
    %v422 = vunpack.c.l.b16 %v133
    %v423 = vunpack.c.h.b16 %v133
    %v424 = vunpack.c.l.b16 %v134
    %v425 = vunpack.c.l.b16 %v135
    %v426 = vunpack.c.h.b16 %v135
    %v427 = vunpack.c.l.b16 %v136
    %v428 = vunpack.c.l.b16 %v137
    %v429 = vunpack.c.h.b16 %v137
    %v430 = vunpack.c.l.b16 %v138
    %v431 = vunpack.c.l.b16 %v139
    %v432 = vunpack.c.h.b16 %v139
    %v433 = vunpack.c.l.b16 %v140
    %v434 = vunpack.c.l.b16 %v141
    %v435 = vunpack.c.h.b16 %v141
    %v436 = vunpack.c.l.b16 %v142
    %v437 = vunpack.c.l.b16 %v143
    %v438 = vunpack.c.h.b16 %v143
    %v439 = vunpack.c.l.b16 %v144
    %v440 = vunpack.c.l.b16 %v145
    %v441 = vunpack.c.h.b16 %v145
    %v442 = vunpack.c.l.b16 %v146
    %v443 = vunpack.c.l.b16 %v147
    %v444 = vunpack.c.h.b16 %v147
    %v445 = vunpack.c.l.b16 %v148
    %v446 = vunpack.c.l.b16 %v149
    %v447 = vunpack.c.h.b16 %v149
    %v448 = vunpack.c.l.b16 %v150
    %v449 = vunpack.c.l.b16 %v151
    %v450 = vunpack.c.h.b16 %v151
    %v451 = vunpack.c.l.b16 %v152
    %v452 = vunpack.c.l.b16 %v153
    %v453 = vunpack.c.h.b16 %v153
    %v454 = vunpack.c.l.b16 %v154
    %v455 = vunpack.c.l.b16 %v155
    %v456 = vunpack.c.h.b16 %v155
    %v457 = vunpack.c.l.b16 %v156
    %v458 = vunpack.c.l.b16 %v157
    %v459 = vunpack.c.h.b16 %v157
    %v460 = vunpack.c.l.b16 %v158
    %v461 = vunpack.c.l.b16 %v159
    %v462 = vunpack.c.h.b16 %v159
    %v463 = vunpack.c.l.b16 %v160
    %v464 = vunpack.c.l.b16 %v161
    %v465 = vunpack.c.h.b16 %v161
    %v466 = vunpack.c.l.b16 %v162
    %v467 = vunpack.c.l.b16 %v163
    %v468 = vunpack.c.h.b16 %v163
    %v469 = vunpack.c.l.b16 %v164
    %v470 = vunpack.c.l.b16 %v165
    %v471 = vunpack.c.h.b16 %v165
    %v472 = vunpack.c.l.b16 %v166
    %v473 = vunpack.c.l.b16 %v167
    %v474 = vunpack.c.h.b16 %v167
    %v475 = vunpack.c.l.b16 %v168
    %v476 = vunpack.c.l.b16 %v169
    %v477 = vunpack.c.h.b16 %v169
    %v478 = vunpack.c.l.b16 %v170
    %v479 = vunpack.c.l.b16 %v171
    %v480 = vunpack.c.h.b16 %v171
    %v481 = vunpack.c.l.b16 %v172
    %v482 = vunpack.c.l.b16 %v173
    %v483 = vunpack.c.h.b16 %v173
    %v484 = vunpack.c.l.b16 %v174
    %v485 = vunpack.c.l.b16 %v175
    %v486 = vunpack.c.h.b16 %v175
    %v487 = vunpack.c.l.b16 %v176
    %v488 = vunpack.c.l.b16 %v177
    %v489 = vunpack.c.h.b16 %v177
    %v490 = vunpack.c.l.b16 %v178
    %v491 = vunpack.c.l.b16 %v179
    %v492 = vunpack.c.h.b16 %v179
    %v493 = vunpack.c.l.b16 %v180
    %v494 = vunpack.c.l.b16 %v181
    %v495 = vunpack.c.h.b16 %v181
    %v496 = vunpack.c.l.b16 %v182
    %v497 = vunpack.c.l.b16 %v183
    %v498 = vunpack.c.h.b16 %v183
    %v499 = vunpack.c.l.b16 %v184
    %v500 = vunpack.c.l.b16 %v185
    %v501 = vunpack.c.h.b16 %v185
    %v502 = vunpack.c.l.b16 %v186
    %v503 = vunpack.c.l.b16 %v187
    %v504 = vunpack.c.h.b16 %v187
    %v505 = vunpack.c.l.b16 %v188
    %v506 = vunpack.c.l.b16 %v189
    %v507 = vunpack.c.h.b16 %v189
    %v508 = vunpack.c.l.b16 %v190
    %v509 = vunpack.c.l.b16 %v191
    %v510 = vunpack.c.h.b16 %v191
    %v511 = vunpack.c.l.b16 %v192
    %v512 = vunpack.c.l.b16 %v193
    %v513 = vunpack.c.h.b16 %v193
    %v514 = vunpack.c.l.b16 %v194
    %v515 = vunpack.c.l.b16 %v195
    %v516 = vunpack.c.h.b16 %v195
    %v517 = vunpack.c.l.b16 %v196
    %v518 = vunpack.c.l.b16 %v197
    %v519 = vunpack.c.h.b16 %v197
    %v520 = vunpack.c.l.b16 %v198
    %v521 = vunpack.c.l.b16 %v199
    %v522 = vunpack.c.h.b16 %v199
    %v523 = vunpack.c.l.b16 %v200
    %v524 = vunpack.c.l.b16 %v201
    %v525 = vunpack.c.h.b16 %v201
    %v526 = vunpack.c.l.b16 %v202
    %v527 = vunpack.c.l.b16 %v203
    %v528 = vunpack.c.h.b16 %v203
    %v529 = vunpack.c.l.b16 %v204
    %v530 = vunpack.c.l.b16 %v205
    %v531 = vunpack.c.h.b16 %v205
    %v532 = vunpack.c.l.b16 %v206
    %v533 = vunpack.c.l.b16 %v207
    %v534 = vunpack.c.h.b16 %v207
    %v535 = vunpack.c.l.b16 %v208
    %v536 = vunpack.c.l.b16 %v209
    %v537 = vunpack.c.h.b16 %v209
    %v538 = vunpack.c.l.b16 %v210
    %v539 = vunpack.c.l.b16 %v211
    %v540 = vunpack.c.h.b16 %v211
    %v541 = vunpack.c.l.b16 %v212
    %v542 = vunpack.c.l.b16 %v213
    %v543 = vunpack.c.h.b16 %v213
    %v544 = vunpack.c.l.b16 %v214
    %v545 = vunpack.c.l.b16 %v215
    %v546 = vunpack.c.h.b16 %v215
    %v547 = vunpack.c.l.b16 %v216
    %v548 = vunpack.c.l.b16 %v217
    %v549 = vunpack.c.h.b16 %v217
    %v550 = vunpack.c.l.b16 %v218
    %v551 = vunpack.c.l.b16 %v219
    %v552 = vunpack.c.h.b16 %v219
    %v553 = vunpack.c.l.b16 %v220
    %v554 = vunpack.c.l.b16 %v221
    %v555 = vunpack.c.h.b16 %v221
    %v556 = vunpack.c.l.b16 %v222
    %v557 = vpack.c.b16 %v368, %v365
    %v558 = vpack.c.b16 %v369, %v366
    %v559 = vpack.c.b16 %v370, %v367
    %v560 = vpack.c.b16 %v374, %v371
    %v561 = vpack.c.b16 %v375, %v372
    %v562 = vpack.c.b16 %v376, %v373
    %v563 = vpack.c.b16 %v380, %v377
    %v564 = vpack.c.b16 %v381, %v378
    %v565 = vpack.c.b16 %v382, %v379
    %v566 = vpack.c.b16 %v386, %v383
    %v567 = vpack.c.b16 %v387, %v384
    %v568 = vpack.c.b16 %v388, %v385
    %v569 = vpack.c.b16 %v392, %v389
    %v570 = vpack.c.b16 %v393, %v390
    %v571 = vpack.c.b16 %v394, %v391
    %v572 = vpack.c.b16 %v398, %v395
    %v573 = vpack.c.b16 %v399, %v396
    %v574 = vpack.c.b16 %v400, %v397
    %v575 = vpack.c.b16 %v404, %v401
    %v576 = vpack.c.b16 %v405, %v402
    %v577 = vpack.c.b16 %v406, %v403
    %v578 = vpack.c.b16 %v410, %v407
    %v579 = vpack.c.b16 %v411, %v408
    %v580 = vpack.c.b16 %v412, %v409
    %v581 = vpack.c.b16 %v416, %v413
    %v582 = vpack.c.b16 %v417, %v414
    %v583 = vpack.c.b16 %v418, %v415
    %v584 = vpack.c.b16 %v422, %v419
    %v585 = vpack.c.b16 %v423, %v420
    %v586 = vpack.c.b16 %v424, %v421
    %v587 = vpack.c.b16 %v428, %v425
    %v588 = vpack.c.b16 %v429, %v426
    %v589 = vpack.c.b16 %v430, %v427
    %v590 = vpack.c.b16 %v434, %v431
    %v591 = vpack.c.b16 %v435, %v432
    %v592 = vpack.c.b16 %v436, %v433
    %v593 = vpack.c.b16 %v440, %v437
    %v594 = vpack.c.b16 %v441, %v438
    %v595 = vpack.c.b16 %v442, %v439
    %v596 = vpack.c.b16 %v446, %v443
    %v597 = vpack.c.b16 %v447, %v444
    %v598 = vpack.c.b16 %v448, %v445
    %v599 = vpack.c.b16 %v452, %v449
    %v600 = vpack.c.b16 %v453, %v450
    %v601 = vpack.c.b16 %v454, %v451
    %v602 = vpack.c.b16 %v458, %v455
    %v603 = vpack.c.b16 %v459, %v456
    %v604 = vpack.c.b16 %v460, %v457
    %v605 = vpack.c.b16 %v464, %v461
    %v606 = vpack.c.b16 %v465, %v462
    %v607 = vpack.c.b16 %v466, %v463
    %v608 = vpack.c.b16 %v470, %v467
    %v609 = vpack.c.b16 %v471, %v468
    %v610 = vpack.c.b16 %v472, %v469
    %v611 = vpack.c.b16 %v476, %v473
    %v612 = vpack.c.b16 %v477, %v474
    %v613 = vpack.c.b16 %v478, %v475
    %v614 = vpack.c.b16 %v482, %v479
    %v615 = vpack.c.b16 %v483, %v480
    %v616 = vpack.c.b16 %v484, %v481
    %v617 = vpack.c.b16 %v488, %v485
    %v618 = vpack.c.b16 %v489, %v486
    %v619 = vpack.c.b16 %v490, %v487
    %v620 = vpack.c.b16 %v494, %v491
    %v621 = vpack.c.b16 %v495, %v492
    %v622 = vpack.c.b16 %v496, %v493
    %v623 = vpack.c.b16 %v500, %v497
    %v624 = vpack.c.b16 %v501, %v498
    %v625 = vpack.c.b16 %v502, %v499
    %v626 = vpack.c.b16 %v506, %v503
    %v627 = vpack.c.b16 %v507, %v504
    %v628 = vpack.c.b16 %v508, %v505
    %v629 = vpack.c.b16 %v512, %v509
    %v630 = vpack.c.b16 %v513, %v510
    %v631 = vpack.c.b16 %v514, %v511
    %v632 = vpack.c.b16 %v518, %v515
    %v633 = vpack.c.b16 %v519, %v516
    %v634 = vpack.c.b16 %v520, %v517
    %v635 = vpack.c.b16 %v524, %v521
    %v636 = vpack.c.b16 %v525, %v522
    %v637 = vpack.c.b16 %v526, %v523
    %v638 = vpack.c.b16 %v530, %v527
    %v639 = vpack.c.b16 %v531, %v528
    %v640 = vpack.c.b16 %v532, %v529
    %v641 = vpack.c.b16 %v536, %v533
    %v642 = vpack.c.b16 %v537, %v534
    %v643 = vpack.c.b16 %v538, %v535
    %v644 = vpack.c.b16 %v542, %v539
    %v645 = vpack.c.b16 %v543, %v540
    %v646 = vpack.c.b16 %v544, %v541
    %v647 = vpack.c.b16 %v548, %v545
    %v648 = vpack.c.b16 %v549, %v546
    %v649 = vpack.c.b16 %v550, %v547
    %v650 = vpack.c.b16 %v554, %v551
    %v651 = vpack.c.b16 %v555, %v552
    %v652 = vpack.c.b16 %v556, %v553
    %749 = vmatpush.bf16.msra.mxu0 %v578
    %750 = vmatpush.bf16.msra.mxu0 %v575
    %751 = vmatpush.bf16.msra.mxu0 %v572
    %752 = vmatpush.bf16.msra.mxu0 %v569
    %753 = vmatpush.bf16.msra.mxu0 %v566
    %754 = vmatpush.bf16.msra.mxu0 %v563
    %755 = vmatpush.bf16.msra.mxu0 %v560
    %756 = vmatpush.bf16.msra.mxu0 %v557
    %757 = vmatmul.bf16.gmra.mxu0 %v229
    %v758 = vpop.f32.mrf.mxu0
    %v759 = vadd.f32 0.0, %v758
    %v760 = vpop.f32.mrf.mxu0
    %761 = vdwg.mxu0
    %762 = vmatpush.bf16.msra.mxu0 %v602
    %763 = vmatpush.bf16.msra.mxu0 %v599
    %764 = vmatpush.bf16.msra.mxu0 %v596
    %765 = vmatpush.bf16.msra.mxu0 %v593
    %766 = vmatpush.bf16.msra.mxu0 %v590
    %767 = vmatpush.bf16.msra.mxu0 %v587
    %768 = vmatpush.bf16.msra.mxu0 %v584
    %769 = vmatpush.bf16.msra.mxu0 %v581
    %770 = vmatmul.bf16.gmra.mxu0 %v230
    %v771 = vpop.f32.mrf.mxu0
    %v772 = vadd.f32 %v759, %v771
    %v773 = vpop.f32.mrf.mxu0
    %774 = vdwg.mxu0
    %775 = vmatpush.bf16.msra.mxu0 %v626
    %776 = vmatpush.bf16.msra.mxu0 %v623
    %777 = vmatpush.bf16.msra.mxu0 %v620
    %778 = vmatpush.bf16.msra.mxu0 %v617
    %779 = vmatpush.bf16.msra.mxu0 %v614
    %780 = vmatpush.bf16.msra.mxu0 %v611
    %781 = vmatpush.bf16.msra.mxu0 %v608
    %782 = vmatpush.bf16.msra.mxu0 %v605
    %783 = vmatmul.bf16.gmra.mxu0 %v231
    %v784 = vpop.f32.mrf.mxu0
    %v785 = vadd.f32 %v772, %v784
    %v786 = vpop.f32.mrf.mxu0
    %787 = vdwg.mxu0
    %788 = vmatpush.bf16.msra.mxu0 %v650
    %789 = vmatpush.bf16.msra.mxu0 %v647
    %790 = vmatpush.bf16.msra.mxu0 %v644
    %791 = vmatpush.bf16.msra.mxu0 %v641
    %792 = vmatpush.bf16.msra.mxu0 %v638
    %793 = vmatpush.bf16.msra.mxu0 %v635
    %794 = vmatpush.bf16.msra.mxu0 %v632
    %795 = vmatpush.bf16.msra.mxu0 %v629
    %796 = vmatmul.bf16.gmra.mxu0 %v232
    %v797 = vpop.f32.mrf.mxu0
    %v798 = vadd.f32 %v785, %v797
    %v799 = vpop.f32.mrf.mxu0
    %800 = vdwg.mxu0
    %801 = vmatpush.bf16.msra.mxu0 %v579
    %802 = vmatpush.bf16.msra.mxu0 %v576
    %803 = vmatpush.bf16.msra.mxu0 %v573
    %804 = vmatpush.bf16.msra.mxu0 %v570
    %805 = vmatpush.bf16.msra.mxu0 %v567
    %806 = vmatpush.bf16.msra.mxu0 %v564
    %807 = vmatpush.bf16.msra.mxu0 %v561
    %808 = vmatpush.bf16.msra.mxu0 %v558
    %809 = vmatmul.bf16.gmra.mxu0 %v229
    %v810 = vpop.f32.mrf.mxu0
    %v811 = vadd.f32 0.0, %v810
    %v812 = vpop.f32.mrf.mxu0
    %813 = vdwg.mxu0
    %814 = vmatpush.bf16.msra.mxu0 %v603
    %815 = vmatpush.bf16.msra.mxu0 %v600
    %816 = vmatpush.bf16.msra.mxu0 %v597
    %817 = vmatpush.bf16.msra.mxu0 %v594
    %818 = vmatpush.bf16.msra.mxu0 %v591
    %819 = vmatpush.bf16.msra.mxu0 %v588
    %820 = vmatpush.bf16.msra.mxu0 %v585
    %821 = vmatpush.bf16.msra.mxu0 %v582
    %822 = vmatmul.bf16.gmra.mxu0 %v230
    %v823 = vpop.f32.mrf.mxu0
    %v824 = vadd.f32 %v811, %v823
    %v825 = vpop.f32.mrf.mxu0
    %826 = vdwg.mxu0
    %827 = vmatpush.bf16.msra.mxu0 %v627
    %828 = vmatpush.bf16.msra.mxu0 %v624
    %829 = vmatpush.bf16.msra.mxu0 %v621
    %830 = vmatpush.bf16.msra.mxu0 %v618
    %831 = vmatpush.bf16.msra.mxu0 %v615
    %832 = vmatpush.bf16.msra.mxu0 %v612
    %833 = vmatpush.bf16.msra.mxu0 %v609
    %834 = vmatpush.bf16.msra.mxu0 %v606
    %835 = vmatmul.bf16.gmra.mxu0 %v231
    %v836 = vpop.f32.mrf.mxu0
    %v837 = vadd.f32 %v824, %v836
    %v838 = vpop.f32.mrf.mxu0
    %839 = vdwg.mxu0
    %840 = vmatpush.bf16.msra.mxu0 %v651
    %841 = vmatpush.bf16.msra.mxu0 %v648
    %842 = vmatpush.bf16.msra.mxu0 %v645
    %843 = vmatpush.bf16.msra.mxu0 %v642
    %844 = vmatpush.bf16.msra.mxu0 %v639
    %845 = vmatpush.bf16.msra.mxu0 %v636
    %846 = vmatpush.bf16.msra.mxu0 %v633
    %847 = vmatpush.bf16.msra.mxu0 %v630
    %848 = vmatmul.bf16.gmra.mxu0 %v232
    %v849 = vpop.f32.mrf.mxu0
    %v850 = vadd.f32 %v837, %v849
    %v851 = vpop.f32.mrf.mxu0
    %852 = vdwg.mxu0
    %853 = vmatpush.bf16.msra.mxu0 %v580
    %854 = vmatpush.bf16.msra.mxu0 %v577
    %855 = vmatpush.bf16.msra.mxu0 %v574
    %856 = vmatpush.bf16.msra.mxu0 %v571
    %857 = vmatpush.bf16.msra.mxu0 %v568
    %858 = vmatpush.bf16.msra.mxu0 %v565
    %859 = vmatpush.bf16.msra.mxu0 %v562
    %860 = vmatpush.bf16.msra.mxu0 %v559
    %861 = vmatmul.bf16.gmra.mxu0 %v229
    %v862 = vpop.f32.mrf.mxu0
    %v863 = vadd.f32 0.0, %v862
    %v864 = vpop.f32.mrf.mxu0
    %865 = vdwg.mxu0
    %866 = vmatpush.bf16.msra.mxu0 %v604
    %867 = vmatpush.bf16.msra.mxu0 %v601
    %868 = vmatpush.bf16.msra.mxu0 %v598
    %869 = vmatpush.bf16.msra.mxu0 %v595
    %870 = vmatpush.bf16.msra.mxu0 %v592
    %871 = vmatpush.bf16.msra.mxu0 %v589
    %872 = vmatpush.bf16.msra.mxu0 %v586
    %873 = vmatpush.bf16.msra.mxu0 %v583
    %874 = vmatmul.bf16.gmra.mxu0 %v230
    %v875 = vpop.f32.mrf.mxu0
    %v876 = vadd.f32 %v863, %v875
    %v877 = vpop.f32.mrf.mxu0
    %878 = vdwg.mxu0
    %879 = vmatpush.bf16.msra.mxu0 %v628
    %880 = vmatpush.bf16.msra.mxu0 %v625
    %881 = vmatpush.bf16.msra.mxu0 %v622
    %882 = vmatpush.bf16.msra.mxu0 %v619
    %883 = vmatpush.bf16.msra.mxu0 %v616
    %884 = vmatpush.bf16.msra.mxu0 %v613
    %885 = vmatpush.bf16.msra.mxu0 %v610
    %886 = vmatpush.bf16.msra.mxu0 %v607
    %887 = vmatmul.bf16.gmra.mxu0 %v231
    %v888 = vpop.f32.mrf.mxu0
    %v889 = vadd.f32 %v876, %v888
    %v890 = vpop.f32.mrf.mxu0
    %891 = vdwg.mxu0
    %892 = vmatpush.bf16.msra.mxu0 %v652
    %893 = vmatpush.bf16.msra.mxu0 %v649
    %894 = vmatpush.bf16.msra.mxu0 %v646
    %895 = vmatpush.bf16.msra.mxu0 %v643
    %896 = vmatpush.bf16.msra.mxu0 %v640
    %897 = vmatpush.bf16.msra.mxu0 %v637
    %898 = vmatpush.bf16.msra.mxu0 %v634
    %899 = vmatpush.bf16.msra.mxu0 %v631
    %900 = vmatmul.bf16.gmra.mxu0 %v232
    %v901 = vpop.f32.mrf.mxu0
    %v902 = vadd.f32 %v889, %v901
    %v903 = vpop.f32.mrf.mxu0
    %904 = vdwg.mxu0
    %v905 = vadd.f32 %v90, %v798
    %v906 = vadd.f32 %v91, %v850
    %v907 = vadd.f32 %v92, %v902
    %908 = vst [vmem:[#allocation2] sm:$0xff] %v905
    %909 = vst [vmem:[#allocation2 + $0x8] sm:$0xff] %v906
    %910 = vst [vmem:[#allocation2 + $0x10] sm:$0xff] %v907
    // Predicated region
    $region46: #{tpu_custom_call.1} parent=1 // pred_check
      %p911 = pneg %p83
    $region47: #{tpu_custom_call.1} parent=1 // pred_check_branch
      %913 = sbr.rel (%p911) target = $region49
    $region48: #{tpu_custom_call.1} parent=1 // pred_region
      %v914 = vld [vmem:[#allocation2] sm:$0xff]
      %v915 = vld [vmem:[#allocation2 + $0x8] sm:$0xff]
      %v916 = vld [vmem:[#allocation2 + $0x10] sm:$0xff]
      %v917 = vld [vmem:[#allocation8] sm:$0x7]
      %v919 = vperm.slane %v917, 0
      %v920 = vperm.slane %v917, 1
      %v921 = vperm.slane %v917, 2
      %v925 = vadd.f32 %v914, %v919
      %v926 = vadd.f32 %v915, %v920
      %v927 = vadd.f32 %v916, %v921
      %v928 = vsub.f32 0.0, %v925
      %v929 = vmul.f32 %v928, 1.442695
      %v930 = vpow.pop %v929
      %v931 = vadd.f32 %v930, 1.0
      %v932 = vrcp.pop %v931
      %v933 = vmul.f32 %v931, %v932
      %v934 = vsub.f32 1.0, %v933
      %v935 = vmul.f32 %v932, %v934
      %v936 = vadd.f32 %v932, %v935
      %vm937 = vweird.f32 %v931
      %vm938 = vweird.f32 %v932
      %vm939 = vmor %vm937, %vm938
      %v940 = vsel %vm939, %v932, %v936
      %v941 = vand.u32 2147483647, %v931
      %vm942 = vcmp.eq.f32.partialorder %v941, 8.507059e+37
      %v943 = vand.u32 %v931, 2147483648
      %v944 = vor.u32 1.1754944e-38, %v943
      %v945 = vsel %vm942, %v944, %v940
      %v946 = vmul.f32 1.0, %v945
      %v947 = vsub.f32 1.0, %v946
      %vm948 = vcmp.gt.f32.partialorder %v926, 0.0
      %vm949 = vcmp.gt.f32.partialorder %v927, 0.0
      %v950 = vmul.f32 %v926, 0.01
      %v951 = vmul.f32 %v927, 0.01
      %v952 = vsel %vm948, %v926, %v950
      %v953 = vsel %vm949, %v927, %v951
      %v954 = vlaneseq
      %v955 = vand.u32 %v954, 127
      %v956 = vadd.s32 %v955, 128
      %vm957 = vcmp.lt.s32.totalorder %v955, 128
      %vm958 = vcmp.lt.s32.totalorder %v956, 128
      %960 = vset.pattern.permute.xlu0 0
      %961 = vperm.xlu0 %960, %v946
      %v962 = vpop.permute.xlu0 %961
      %965 = vset.pattern.permute.xlu0 0
      %966 = vperm.xlu0 %965, %v947
      %v967 = vpop.permute.xlu0 %966
      %v969 = vsel %vm957, %v962, %v967
      %v970 = vsel %vm958, %v962, %v967
      %v971 = vmul.f32 %v952, %v969
      %v972 = vmul.f32 %v953, %v970
      %v973 = vpack.c.bf16 %v971, %v971
      %v974 = vpack.c.bf16 %v972, %v972
      %v975 = vld [vmem:[#allocation9] sm:$0xf]
      %v976 = vld [vmem:[#allocation9 + $0x4] sm:$0xf]
      %v977 = vld [vmem:[#allocation9 + $0x8] sm:$0xf]
      %v978 = vld [vmem:[#allocation9 + $0xc] sm:$0xf]
      %v979 = vld [vmem:[#allocation9 + $0x10] sm:$0xf]
      %v980 = vld [vmem:[#allocation9 + $0x14] sm:$0xf]
      %v981 = vld [vmem:[#allocation9 + $0x18] sm:$0xf]
      %v982 = vld [vmem:[#allocation9 + $0x1c] sm:$0xf]
      %v983 = vld [vmem:[#allocation9 + $0x20] sm:$0xf]
      %v984 = vld [vmem:[#allocation9 + $0x24] sm:$0xf]
      %v985 = vld [vmem:[#allocation9 + $0x28] sm:$0xf]
      %v986 = vld [vmem:[#allocation9 + $0x2c] sm:$0xf]
      %v987 = vld [vmem:[#allocation9 + $0x30] sm:$0xf]
      %v988 = vld [vmem:[#allocation9 + $0x34] sm:$0xf]
      %v989 = vld [vmem:[#allocation9 + $0x38] sm:$0xf]
      %v990 = vld [vmem:[#allocation9 + $0x3c] sm:$0xf]
      %v991 = vld [vmem:[#allocation9 + $0x40] sm:$0xf]
      %v992 = vld [vmem:[#allocation9 + $0x44] sm:$0xf]
      %v993 = vld [vmem:[#allocation9 + $0x48] sm:$0xf]
      %v994 = vld [vmem:[#allocation9 + $0x4c] sm:$0xf]
      %v995 = vld [vmem:[#allocation9 + $0x50] sm:$0xf]
      %v996 = vld [vmem:[#allocation9 + $0x54] sm:$0xf]
      %v997 = vld [vmem:[#allocation9 + $0x58] sm:$0xf]
      %v998 = vld [vmem:[#allocation9 + $0x5c] sm:$0xf]
      %v999 = vld [vmem:[#allocation9 + $0x60] sm:$0xf]
      %v1000 = vld [vmem:[#allocation9 + $0x64] sm:$0xf]
      %v1001 = vld [vmem:[#allocation9 + $0x68] sm:$0xf]
      %v1002 = vld [vmem:[#allocation9 + $0x6c] sm:$0xf]
      %v1003 = vld [vmem:[#allocation9 + $0x70] sm:$0xf]
      %v1004 = vld [vmem:[#allocation9 + $0x74] sm:$0xf]
      %v1005 = vld [vmem:[#allocation9 + $0x78] sm:$0xf]
      %v1006 = vld [vmem:[#allocation9 + $0x7c] sm:$0xf]
      %v1007 = vld [vmem:[%s4] sm:$0x1]
      %v1009 = vperm.slane %v1007, 0
      %v1011 = vmul.f32 %v962, %v1009
      %v1044 = vunpack.c.l.b16 %v975
      %v1045 = vunpack.c.l.b16 %v976
      %v1046 = vunpack.c.l.b16 %v977
      %v1047 = vunpack.c.l.b16 %v978
      %v1048 = vunpack.c.l.b16 %v979
      %v1049 = vunpack.c.l.b16 %v980
      %v1050 = vunpack.c.l.b16 %v981
      %v1051 = vunpack.c.l.b16 %v982
      %v1052 = vunpack.c.l.b16 %v983
      %v1053 = vunpack.c.l.b16 %v984
      %v1054 = vunpack.c.l.b16 %v985
      %v1055 = vunpack.c.l.b16 %v986
      %v1056 = vunpack.c.l.b16 %v987
      %v1057 = vunpack.c.l.b16 %v988
      %v1058 = vunpack.c.l.b16 %v989
      %v1059 = vunpack.c.l.b16 %v990
      %v1060 = vunpack.c.l.b16 %v991
      %v1061 = vunpack.c.l.b16 %v992
      %v1062 = vunpack.c.l.b16 %v993
      %v1063 = vunpack.c.l.b16 %v994
      %v1064 = vunpack.c.l.b16 %v995
      %v1065 = vunpack.c.l.b16 %v996
      %v1066 = vunpack.c.l.b16 %v997
      %v1067 = vunpack.c.l.b16 %v998
      %v1068 = vunpack.c.l.b16 %v999
      %v1069 = vunpack.c.l.b16 %v1000
      %v1070 = vunpack.c.l.b16 %v1001
      %v1071 = vunpack.c.l.b16 %v1002
      %v1072 = vunpack.c.l.b16 %v1003
      %v1073 = vunpack.c.l.b16 %v1004
      %v1074 = vunpack.c.l.b16 %v1005
      %v1075 = vunpack.c.l.b16 %v1006
      %v1076 = vpack.c.b16 %v1045, %v1044
      %v1077 = vpack.c.b16 %v1047, %v1046
      %v1078 = vpack.c.b16 %v1049, %v1048
      %v1079 = vpack.c.b16 %v1051, %v1050
      %v1080 = vpack.c.b16 %v1053, %v1052
      %v1081 = vpack.c.b16 %v1055, %v1054
      %v1082 = vpack.c.b16 %v1057, %v1056
      %v1083 = vpack.c.b16 %v1059, %v1058
      %v1084 = vpack.c.b16 %v1061, %v1060
      %v1085 = vpack.c.b16 %v1063, %v1062
      %v1086 = vpack.c.b16 %v1065, %v1064
      %v1087 = vpack.c.b16 %v1067, %v1066
      %v1088 = vpack.c.b16 %v1069, %v1068
      %v1089 = vpack.c.b16 %v1071, %v1070
      %v1090 = vpack.c.b16 %v1073, %v1072
      %v1091 = vpack.c.b16 %v1075, %v1074
      %1108 = vmatpush.bf16.msra.mxu0 %v1083
      %1109 = vmatpush.bf16.msra.mxu0 %v1082
      %1110 = vmatpush.bf16.msra.mxu0 %v1081
      %1111 = vmatpush.bf16.msra.mxu0 %v1080
      %1112 = vmatpush.bf16.msra.mxu0 %v1079
      %1113 = vmatpush.bf16.msra.mxu0 %v1078
      %1114 = vmatpush.bf16.msra.mxu0 %v1077
      %1115 = vmatpush.bf16.msra.mxu0 %v1076
      %1116 = vmatmul.bf16.gmra.mxu0 %v973
      %v1117 = vpop.f32.mrf.mxu0
      %v1118 = vadd.f32 %v1011, %v1117
      %v1119 = vpop.f32.mrf.mxu0
      %1120 = vdwg.mxu0
      %1121 = vmatpush.bf16.msra.mxu0 %v1091
      %1122 = vmatpush.bf16.msra.mxu0 %v1090
      %1123 = vmatpush.bf16.msra.mxu0 %v1089
      %1124 = vmatpush.bf16.msra.mxu0 %v1088
      %1125 = vmatpush.bf16.msra.mxu0 %v1087
      %1126 = vmatpush.bf16.msra.mxu0 %v1086
      %1127 = vmatpush.bf16.msra.mxu0 %v1085
      %1128 = vmatpush.bf16.msra.mxu0 %v1084
      %1129 = vmatmul.bf16.gmra.mxu0 %v974
      %v1130 = vpop.f32.mrf.mxu0
      %v1131 = vadd.f32 %v1118, %v1130
      %v1132 = vpop.f32.mrf.mxu0
      %1133 = vdwg.mxu0
      %v1134 = vld [vmem:[%s5] sm:$0x1]
      %v1136 = vperm.slane %v1134, 0
      %v1138 = vmul.f32 %v967, %v1136
      %v1139 = vadd.f32 %v1131, %v1138
      %1140 = vst [vmem:[#allocation11] sm:$0xff] %v1139
    $region49: #{tpu_custom_call.1} parent=1 // pred_fallthru
      _
    // Predicated region
    $region50: #{tpu_custom_call.1} parent=1 // pred_check
      _
    $region51: #{tpu_custom_call.1} parent=1 // pred_check_branch
      %1142 = sbr.rel (0) target = $region53
    $region52: #{tpu_custom_call.1} parent=1 // pred_region
      %1144 = vsyncadd [#allocation5], 0
      %s1146 = sshll.u32 [#allocation11], 4
      %s1147 = int_to_ptr.vmem [resolvable:$true] %s1146
      %s1148 = sshll.u32 %s6, 4
      %s1149 = int_to_ptr.hbm [resolvable:$true] %s1148
      %1151 = dma.vmem_to_hbm [thread:$0]  %s1147, 128, %s1149, [#allocation5]
    $region53: #{tpu_custom_call.1} parent=1 // pred_fallthru
      _
    // Predicated region
    $region54: #{tpu_custom_call.1} parent=1 // pred_check
      _
    $region55: #{tpu_custom_call.1} parent=1 // pred_check_branch
      %1153 = sbr.rel (0) target = $region57
    $region56: #{tpu_custom_call.1} parent=1 // pred_region
      %1155 = dma.done [#allocation5], 128
    $region57: #{tpu_custom_call.1} parent=1 // pred_fallthru
      _
    %1156 = vsyncpa [#allocation4], 1
    %1157 = vsyncpa [#allocation7], 1
    %1158 = vsyncpa [#allocation10], 1
    %1159 = vsyncpa [#allocation5], 1

</llo_original>
